<compile_context>
chip_gen: v7x
topology: tpu7x:2x2x1
jax: 0.10.0
libtpu: 0.0.40
codegen_flags: <defaults>
</compile_context>

<pallas_src>
import functools

import jax
import jax.numpy as jnp
from jax.experimental import pallas as pl
from jax.experimental.pallas import tpu as pltpu

LANES = 128
SUBLANES = 8
MAX_TILE_ROWS = 4096          # 4096 x 128 f32 = 2 MiB per pipeline buffer


def _cdiv(a, b):
    return -(-a // b)


def _round_up(a, b):
    return _cdiv(a, b) * b


@functools.lru_cache(maxsize=1)
def _num_tensorcores():
    """2 on chips with two TensorCores (v7x), else 1 (v5e / v6e)."""
    try:
        info = pltpu.get_tpu_info()
        for name in ("num_tensorcores", "tensorcore_count",
                     "num_cores_per_chip", "cores_per_chip", "num_cores"):
            v = getattr(info, name, None)
            if isinstance(v, int) and v >= 1:
                return min(int(v), 2)
    except Exception:
        pass
    try:
        if "v7" in jax.devices()[0].device_kind.lower():
            return 2
    except Exception:
        pass
    return 1


def _focal_loss_kernel(x_ref, t_ref, out_ref, *, gamma, pos_weight, n_total,
                       tile_rows, tiles_per_core, need_mask):
    c = pl.program_id(0)
    i = pl.program_id(1)

    @pl.when(i == 0)
    def _():
        out_ref[...] = jnp.zeros_like(out_ref)

    x = x_ref[...].astype(jnp.float32)
    t = t_ref[...].astype(jnp.float32)

    # Numerically-stable log-sigmoid pair; z = exp(-|x|) is reused for sigmoid.
    neg_abs = -jnp.abs(x)
    z = jnp.exp(neg_abs)
    log1p_term = jnp.log1p(z)
    log_sig_pos = jnp.minimum(x, 0.0) - log1p_term       # log(sigmoid(x))
    log_sig_neg = jnp.minimum(-x, 0.0) - log1p_term      # log(1 - sigmoid(x))

    # binary_cross_entropy_with_logits(..., pos_weight, reduction='none')
    if pos_weight == 1.0:
        bce = -(t * log_sig_pos + (1.0 - t) * log_sig_neg)
    else:
        bce = -(pos_weight * t * log_sig_pos + (1.0 - t) * log_sig_neg)

    # sigmoid(x) without a second exp: sigmoid(|x|) = 1/(1+z); reflect for x<0.
    inv = 1.0 / (1.0 + z)
    probs = jnp.where(x >= 0.0, inv, z * inv)
    pt = probs * t + (1.0 - probs) * (1.0 - t)
    omp = 1.0 - pt

    # Static specialization of the focal weight for small integer gamma.
    g = float(gamma)
    if g.is_integer() and 0.0 <= g <= 8.0:
        ig = int(g)
        if ig == 0:
            focal_w = jnp.ones_like(omp)
        else:
            focal_w = omp
            for _ in range(ig - 1):
                focal_w = focal_w * omp
    else:
        focal_w = jnp.power(jnp.maximum(omp, 0.0), g)    # clamp avoids NaN

    focal = focal_w * bce

    def accumulate(vals):
        # Per-tile sublane reduction -> (1, 128); accumulate into the resident
        # output block (tiny RMW instead of a tile_rows x 128 slab).
        partial = jnp.sum(vals, axis=0, keepdims=True)
        out_ref[...] += partial.reshape(1, 1, LANES)

    if need_mask:
        tile_elems = tile_rows * LANES
        base = (c * tiles_per_core + i) * tile_elems
        fully_valid = (base + tile_elems) <= n_total

        @pl.when(fully_valid)
        def _():
            accumulate(focal)

        @pl.when(jnp.logical_not(fully_valid))
        def _():
            # Only boundary / overshoot tiles pay for the iota + mask.
            rows = jax.lax.broadcasted_iota(jnp.int32, (tile_rows, LANES), 0)
            lanes = jax.lax.broadcasted_iota(jnp.int32, (tile_rows, LANES), 1)
            idx = base + rows * LANES + lanes
            accumulate(jnp.where(idx < n_total, focal, 0.0))
    else:
        accumulate(focal)


def focal_loss(inputs, targets, gamma=2.0, pos_weight=1.0):
    """Mean focal loss over all elements (matches Loss(reduction='mean'))."""
    assert inputs.shape == targets.shape
    n_total = int(inputs.size)

    x_flat = inputs.reshape(-1)
    t_flat = targets.reshape(-1)

    # Lane-dense slab.  Pad only to the next multiple of 128 when needed
    # (<= 127 elements); a lane-aligned numel reshapes for free (bitcast).
    rows = _cdiv(n_total, LANES)
    pad = rows * LANES - n_total
    if pad:
        x_flat = jnp.pad(x_flat, (0, pad))
        t_flat = jnp.pad(t_flat, (0, pad))
    x2 = x_flat.reshape(rows, LANES)      # native dtype; upcast in kernel
    t2 = t_flat.reshape(rows, LANES)

    # Row-group granularity: 8 for 4-byte dtypes, 16 for bf16/fp16, 32 for 8-bit.
    itemsize = min(x2.dtype.itemsize, t2.dtype.itemsize)
    row_align = max(SUBLANES, 32 // max(itemsize, 1))

    # Tiling: split rows across TensorCores (leading "parallel" axis), then
    # into <= MAX_TILE_ROWS-row tiles on the inner "arbitrary" axis.  Grid
    # coverage may overshoot `rows`; boundary tiles are masked in-kernel.
    num_cores = _num_tensorcores()
    if rows < num_cores * row_align:      # too small to split usefully
        num_cores = 1
    rows_per_core = _cdiv(rows, num_cores)
    tile_rows = min(MAX_TILE_ROWS, _round_up(rows_per_core, row_align))
    tiles_per_core = _cdiv(rows_per_core, tile_rows)
    coverage = num_cores * tiles_per_core * tile_rows * LANES
    need_mask = coverage != n_total

    kernel = functools.partial(
        _focal_loss_kernel,
        gamma=float(gamma),
        pos_weight=float(pos_weight),
        n_total=n_total,
        tile_rows=tile_rows,
        tiles_per_core=tiles_per_core,
        need_mask=need_mask,
    )

    bytes_in = x2.size * x2.dtype.itemsize + t2.size * t2.dtype.itemsize
    cost = pl.CostEstimate(
        flops=20 * coverage,
        transcendentals=3 * coverage,
        bytes_accessed=bytes_in + num_cores * LANES * 4,
    )

    # NOTE (v7x): if xprof shows DMA gaps from the two TCs contending for HBM,
    # try pipeline_mode=pl.Buffered(3) on the two input BlockSpecs below.
    out = pl.pallas_call(
        kernel,
        out_shape=jax.ShapeDtypeStruct((num_cores, 1, LANES), jnp.float32),
        grid_spec=pltpu.PrefetchScalarGridSpec(
            num_scalar_prefetch=0,
            grid=(num_cores, tiles_per_core),
            in_specs=[
                pl.BlockSpec((tile_rows, LANES),
                             lambda c, i: (c * tiles_per_core + i, 0)),
                pl.BlockSpec((tile_rows, LANES),
                             lambda c, i: (c * tiles_per_core + i, 0)),
            ],
            out_specs=pl.BlockSpec((1, 1, LANES), lambda c, i: (c, 0, 0)),
        ),
        compiler_params=pltpu.CompilerParams(
            dimension_semantics=("parallel", "arbitrary")),
        cost_estimate=cost,
    )(x2, t2)

    # reduction == 'mean': sum per-core lane partials, scale by 1/N.
    return jnp.sum(out) * jnp.float32(1.0 / n_total)


def focal_loss_ref(inputs, targets, gamma=2.0, pos_weight=1.0):
    """Pure-JAX reference mirroring the PyTorch module."""
    x = inputs.astype(jnp.float32)
    t = targets.astype(jnp.float32)
    log_sig_pos = jax.nn.log_sigmoid(x)
    log_sig_neg = jax.nn.log_sigmoid(-x)
    bce = -(pos_weight * t * log_sig_pos + (1.0 - t) * log_sig_neg)
    probs = jax.nn.sigmoid(x)
    pt = probs * t + (1.0 - probs) * (1.0 - t)
    return jnp.mean(jnp.power(1.0 - pt, gamma) * bce)


if __name__ == "__main__":
    key = jax.random.PRNGKey(0)
    k1, k2, k3, k4 = jax.random.split(key, 4)

    # Small CNN-style logit map: (batch=2, C=4, H=16, W=16); numel % 128 == 0,
    # so no padding and no mask are traced.
    inputs = jax.random.normal(k1, (2, 4, 16, 16), dtype=jnp.float32)
    targets = (jax.random.uniform(k2, (2, 4, 16, 16)) > 0.5).astype(jnp.float32)
    loss = jax.block_until_ready(focal_loss(inputs, targets, gamma=2.0,
                                            pos_weight=1.0))
    ref = focal_loss_ref(inputs, targets, gamma=2.0, pos_weight=1.0)
    assert jnp.allclose(loss, ref, rtol=1e-5, atol=1e-6), (loss, ref)

    # Ragged size + non-default gamma/pos_weight: exercises pad-to-128, the
    # boundary-tile mask branch, the generic pow and the pos_weight multiply.
    x2_in = jax.random.normal(k3, (3, 5, 7), dtype=jnp.float32)
    t2_in = (jax.random.uniform(k4, (3, 5, 7)) > 0.5).astype(jnp.float32)
    loss2 = jax.block_until_ready(
        focal_loss(x2_in, t2_in, gamma=1.5, pos_weight=2.0))
    ref2 = focal_loss_ref(x2_in, t2_in, gamma=1.5, pos_weight=2.0)
    assert jnp.allclose(loss2, ref2, rtol=1e-5, atol=1e-6), (loss2, ref2)

    # bf16 inputs/targets (halves HBM read bytes on this BW-bound kernel);
    # math is still f32 in-kernel, so it matches the f32-upcast reference.
    xb = inputs.astype(jnp.bfloat16)
    tb = targets.astype(jnp.bfloat16)
    loss3 = jax.block_until_ready(focal_loss(xb, tb, gamma=2.0, pos_weight=1.0))
    ref3 = focal_loss_ref(xb, tb, gamma=2.0, pos_weight=1.0)
    assert jnp.allclose(loss3, ref3, rtol=1e-5, atol=1e-6), (loss3, ref3)

    print("KERNEL_OK")
</pallas_src>

<mosaic_0001>
module attributes {stable_mosaic.version = 11 : i64} {
  func.func @_focal_loss_kernel(%arg0: i32, %arg1: i32, %arg2: memref<16x128xf32, #tpu.memory_space<vmem>>, %arg3: memref<16x128xf32, #tpu.memory_space<vmem>>, %arg4: memref<1x1x128xf32, #tpu.memory_space<vmem>>) attributes {dimension_semantics = [#tpu.dimension_semantics<parallel>, #tpu.dimension_semantics<arbitrary>], iteration_bounds = array<i64: 1, 1>, scalar_prefetch = 0 : i64, scratch_operands = 0 : i64, tpu.core_type = #tpu.core_type<tc>, window_params = [{transform_indices = @transform_0, window_bounds = array<i64: 16, 128>}, {transform_indices = @transform_1, window_bounds = array<i64: 16, 128>}, {transform_indices = @transform_2, window_bounds = array<i64: 1, 1, 128>}]} {
    %c0_i32 = arith.constant 0 : i32
    %0 = arith.cmpi eq, %arg1, %c0_i32 : i32
    %1 = arith.extui %0 : i1 to i32
    %c0_i32_0 = arith.constant 0 : i32
    %2 = arith.cmpi ne, %1, %c0_i32_0 : i32
    scf.if %2 {
      %cst_22 = arith.constant 0.000000e+00 : f32
      %50 = vector.broadcast %cst_22 : f32 to vector<1x1x128xf32>
      %c0_23 = arith.constant 0 : index
      %c0_24 = arith.constant 0 : index
      %c0_25 = arith.constant 0 : index
      %51 = vector.load %arg4[%c0_23, %c0_24, %c0_25] : memref<1x1x128xf32, #tpu.memory_space<vmem>>, vector<1x1x128xf32>
      tpu.vector_store %arg4[%c0_23, %c0_24, %c0_25], %50 {strides = array<i32>} : memref<1x1x128xf32, #tpu.memory_space<vmem>>, vector<1x1x128xf32>,
    } else {
    }
    %c0 = arith.constant 0 : index
    %c0_1 = arith.constant 0 : index
    %3 = vector.load %arg2[%c0, %c0_1] : memref<16x128xf32, #tpu.memory_space<vmem>>, vector<16x128xf32>
    %c0_2 = arith.constant 0 : index
    %c0_3 = arith.constant 0 : index
    %4 = vector.load %arg3[%c0_2, %c0_3] : memref<16x128xf32, #tpu.memory_space<vmem>>, vector<16x128xf32>
    %5 = math.absf %3 : vector<16x128xf32>
    %cst = arith.constant 0.000000e+00 : f32
    %6 = vector.broadcast %cst : f32 to vector<16x128xf32>
    %7 = arith.subf %6, %5 : vector<16x128xf32>
    %8 = math.exp %7 : vector<16x128xf32>
    %9 = math.log1p %8 : vector<16x128xf32>
    %cst_4 = arith.constant 0.000000e+00 : f32
    %10 = vector.broadcast %cst_4 : f32 to vector<16x128xf32>
    %11 = arith.minimumf %3, %10 : vector<16x128xf32>
    %12 = arith.subf %11, %9 : vector<16x128xf32>
    %cst_5 = arith.constant 0.000000e+00 : f32
    %13 = vector.broadcast %cst_5 : f32 to vector<16x128xf32>
    %14 = arith.subf %13, %3 : vector<16x128xf32>
    %cst_6 = arith.constant 0.000000e+00 : f32
    %15 = vector.broadcast %cst_6 : f32 to vector<16x128xf32>
    %16 = arith.minimumf %14, %15 : vector<16x128xf32>
    %17 = arith.subf %16, %9 : vector<16x128xf32>
    %18 = arith.mulf %4, %12 : vector<16x128xf32>
    %cst_7 = arith.constant 1.000000e+00 : f32
    %19 = vector.broadcast %cst_7 : f32 to vector<16x128xf32>
    %20 = arith.subf %19, %4 : vector<16x128xf32>
    %21 = arith.mulf %20, %17 : vector<16x128xf32>
    %22 = arith.addf %18, %21 : vector<16x128xf32>
    %cst_8 = arith.constant 0.000000e+00 : f32
    %23 = vector.broadcast %cst_8 : f32 to vector<16x128xf32>
    %24 = arith.subf %23, %22 : vector<16x128xf32>
    %cst_9 = arith.constant 1.000000e+00 : f32
    %25 = vector.broadcast %cst_9 : f32 to vector<16x128xf32>
    %26 = arith.addf %25, %8 : vector<16x128xf32>
    %cst_10 = arith.constant 1.000000e+00 : f32
    %27 = vector.broadcast %cst_10 : f32 to vector<16x128xf32>
    %28 = arith.divf %27, %26 : vector<16x128xf32>
    %cst_11 = arith.constant 0.000000e+00 : f32
    %29 = vector.broadcast %cst_11 : f32 to vector<16x128xf32>
    %30 = arith.cmpf oge, %3, %29 : vector<16x128xf32>
    %31 = arith.mulf %8, %28 : vector<16x128xf32>
    %32 = arith.select %30, %28, %31 : vector<16x128xi1>, vector<16x128xf32>
    %33 = arith.mulf %32, %4 : vector<16x128xf32>
    %cst_12 = arith.constant 1.000000e+00 : f32
    %34 = vector.broadcast %cst_12 : f32 to vector<16x128xf32>
    %35 = arith.subf %34, %32 : vector<16x128xf32>
    %cst_13 = arith.constant 1.000000e+00 : f32
    %36 = vector.broadcast %cst_13 : f32 to vector<16x128xf32>
    %37 = arith.subf %36, %4 : vector<16x128xf32>
    %38 = arith.mulf %35, %37 : vector<16x128xf32>
    %39 = arith.addf %33, %38 : vector<16x128xf32>
    %cst_14 = arith.constant 1.000000e+00 : f32
    %40 = vector.broadcast %cst_14 : f32 to vector<16x128xf32>
    %41 = arith.subf %40, %39 : vector<16x128xf32>
    %42 = arith.mulf %41, %41 : vector<16x128xf32>
    %43 = arith.mulf %42, %24 : vector<16x128xf32>
    %cst_15 = arith.constant dense<0.000000e+00> : vector<128xf32>
    %44 = vector.multi_reduction <add>, %43, %cst_15 [0] : vector<16x128xf32> to vector<128xf32>
    %45 = vector.shape_cast %44 : vector<128xf32> to vector<1x128xf32>
    %c0_16 = arith.constant 0 : index
    %c0_17 = arith.constant 0 : index
    %c0_18 = arith.constant 0 : index
    %46 = vector.load %arg4[%c0_16, %c0_17, %c0_18] : memref<1x1x128xf32, #tpu.memory_space<vmem>>, vector<1x1x128xf32>
    %47 = vector.shape_cast %45 : vector<1x128xf32> to vector<1x1x128xf32>
    %48 = arith.addf %46, %47 : vector<1x1x128xf32>
    %c0_19 = arith.constant 0 : index
    %c0_20 = arith.constant 0 : index
    %c0_21 = arith.constant 0 : index
    %49 = vector.load %arg4[%c0_19, %c0_20, %c0_21] : memref<1x1x128xf32, #tpu.memory_space<vmem>>, vector<1x1x128xf32>
    tpu.vector_store %arg4[%c0_19, %c0_20, %c0_21], %48 {strides = array<i32>} : memref<1x1x128xf32, #tpu.memory_space<vmem>>, vector<1x1x128xf32>,
    return
  }
  func.func @transform_0(%arg0: i32, %arg1: i32) -> (i32, i32) {
    %c1_i32 = arith.constant 1 : i32
    %0 = arith.muli %arg0, %c1_i32 : i32
    %1 = arith.addi %0, %arg1 : i32
    %c0_i32 = arith.constant 0 : i32
    %c0_i32_0 = arith.constant 0 : i32
    return %1, %c0_i32 : i32, i32
  }
  func.func @transform_1(%arg0: i32, %arg1: i32) -> (i32, i32) {
    %c1_i32 = arith.constant 1 : i32
    %0 = arith.muli %arg0, %c1_i32 : i32
    %1 = arith.addi %0, %arg1 : i32
    %c0_i32 = arith.constant 0 : i32
    %c0_i32_0 = arith.constant 0 : i32
    return %1, %c0_i32 : i32, i32
  }
  func.func @transform_2(%arg0: i32, %arg1: i32) -> (i32, i32, i32) {
    %c0_i32 = arith.constant 0 : i32
    %c0_i32_0 = arith.constant 0 : i32
    %c0_i32_1 = arith.constant 0 : i32
    return %arg0, %c0_i32, %c0_i32_0 : i32, i32, i32
  }
}

</mosaic_0001>

<llo_original>
// kernel: tpu_custom_call.1
$region0: #{tpu_custom_call.1}
  #allocation0 [shape = 'u32[]', space=smem, size = 0x4, offset = 0x4, fixed_abs, tag = 'smem constant byte address 0x4 - core index']
  #allocation1 [shape = 'u32[144,128]{1,0:T(1,128)}', space=vmem, size = 0x12000, scoped, tag = 'internal scratch']
  %s0 = inlined_call_operand.hbm [shape: f32[16,128], index: 0, kind: input, shape index: {}]
  %s1 = inlined_call_operand.hbm [shape: f32[16,128], index: 1, kind: input, shape index: {}]
  %s2 = inlined_call_operand.hbm [shape: f32[1,1,128], index: 2, kind: output, shape index: {}]
  %s3 = sld [smem:[#allocation0]]
  $region30: #{tpu_custom_call.1} parent=0
    _
  %s5 = ssub.s32 1, %s3
  %s6 = scalar_select 0, %s5, %s3
  $region1: #{tpu_custom_call.1} parent=0
    #allocation2 [shape = 'u8[8192]{0}', space=vmem, size = 0x2000, scoped, tag = 'input window, operand 0, single buffered']
    #allocation3 [shape = 's32[1]{0}', space=sflag, size = 0x4, scoped, tag = 'scoped memory for tpu_custom_call.1']
    #allocation4 [shape = 's32[1]{0}', space=sflag, size = 0x4, scoped, tag = 'scoped memory for tpu_custom_call.1']
    #allocation5 [shape = 'u8[8192]{0}', space=vmem, size = 0x2000, scoped, tag = 'input window, operand 1, single buffered']
    #allocation6 [shape = 's32[1]{0}', space=sflag, size = 0x4, scoped, tag = 'scoped memory for tpu_custom_call.1']
    #allocation7 [shape = 'u8[512]{0}', space=vmem, size = 0x400, scoped, tag = 'output window, operand 0, single buffered']
    %7 = vsyncpa [#allocation3], 0
    %8 = vsyncpa [#allocation6], 0
    %9 = vsyncpa [#allocation4], 0
    // Predicated region
    $region2: #{tpu_custom_call.1} parent=1 // pred_check
      _
    $region3: #{tpu_custom_call.1} parent=1 // pred_check_branch
      %11 = sbr.rel (0) target = $region5
    $region4: #{tpu_custom_call.1} parent=1 // pred_region
      %s12 = sadd.s32 0, 0
      %s13 = smul.u32 2, %s12
      %s15 = ssub.s32 256, 256
      %16 = vsyncadd [#allocation3], %s15
      %s17 = smul.addr %s13, 128
      %s18 = scalar_lea.hbm %s0, %s17
      %s19 = sshll.u32 [#allocation2], 4
      %s20 = int_to_ptr.vmem [resolvable:$true] %s19
      %25 = dma.hbm_to_vmem [thread:$0]  %s18, 256, %s20, [#allocation3], 128, 128, 8
    $region5: #{tpu_custom_call.1} parent=1 // pred_fallthru
      _
    // Predicated region
    $region6: #{tpu_custom_call.1} parent=1 // pred_check
      _
    $region7: #{tpu_custom_call.1} parent=1 // pred_check_branch
      %27 = sbr.rel (0) target = $region9
    $region8: #{tpu_custom_call.1} parent=1 // pred_region
      %s28 = sadd.s32 0, 0
      %s29 = smul.u32 2, %s28
      %s31 = ssub.s32 256, 256
      %32 = vsyncadd [#allocation6], %s31
      %s33 = smul.addr %s29, 128
      %s34 = scalar_lea.hbm %s1, %s33
      %s35 = sshll.u32 [#allocation5], 4
      %s36 = int_to_ptr.vmem [resolvable:$true] %s35
      %41 = dma.hbm_to_vmem [thread:$0]  %s34, 256, %s36, [#allocation6], 128, 128, 8
    $region9: #{tpu_custom_call.1} parent=1 // pred_fallthru
      _
    // Predicated region
    $region10: #{tpu_custom_call.1} parent=1 // pred_check
      _
    $region11: #{tpu_custom_call.1} parent=1 // pred_check_branch
      %43 = sbr.rel (0) target = $region13
    $region12: #{tpu_custom_call.1} parent=1 // pred_region
      %44 = dma.done [#allocation3], 256
    $region13: #{tpu_custom_call.1} parent=1 // pred_fallthru
      _
    // Predicated region
    $region14: #{tpu_custom_call.1} parent=1 // pred_check
      _
    $region15: #{tpu_custom_call.1} parent=1 // pred_check_branch
      %46 = sbr.rel (0) target = $region17
    $region16: #{tpu_custom_call.1} parent=1 // pred_region
      %47 = dma.done [#allocation6], 256
    $region17: #{tpu_custom_call.1} parent=1 // pred_fallthru
      _
    %s48 = sadd.s32 0, 0
    %s49 = smul.u32 2, %s48
    %s50 = sadd.s32 0, 0
    %s51 = smul.u32 2, %s50
    %p52 = scmp.eq.s32.totalorder 0, 0
    // Predicated region
    $region18: #{tpu_custom_call.1} parent=1 // pred_check
      %p53 = pneg %p52
    $region19: #{tpu_custom_call.1} parent=1 // pred_check_branch
      %55 = sbr.rel (%p53) target = $region21
    $region20: #{tpu_custom_call.1} parent=1 // pred_region
      %56 = vst [vmem:[#allocation7] sm:$0x1] 0.0
    $region21: #{tpu_custom_call.1} parent=1 // pred_fallthru
      _
    %v57 = vld [vmem:[#allocation2] sm:$0xff]
    %v58 = vld [vmem:[#allocation2 + $0x8] sm:$0xff]
    %v59 = vld [vmem:[#allocation5] sm:$0xff]
    %v60 = vld [vmem:[#allocation5 + $0x8] sm:$0xff]
    %v61 = vand.u32 2147483647, %v57
    %v62 = vand.u32 2147483647, %v58
    %v63 = vsub.f32 0.0, %v61
    %v64 = vsub.f32 0.0, %v62
    %v65 = vmul.f32 %v63, 1.442695
    %v66 = vpow.pop %v65
    %v67 = vmul.f32 %v64, 1.442695
    %v68 = vpow.pop %v67
    %v69 = vadd.f32 %v66, 1.0
    %v70 = vlog2.pop %v69
    %v71 = vmul.f32 %v70, 0.6931472
    %v72 = vmul.f32 -0.5, %v66
    %v73 = vadd.f32 %v72, 1.0
    %v74 = vmul.f32 %v73, %v66
    %v75 = vand.u32 2147483647, %v66
    %vm76 = vcmp.lt.f32.partialorder %v75, 0.0004427343
    %v77 = vsel %vm76, %v74, %v71
    %v78 = vadd.f32 %v68, 1.0
    %v79 = vlog2.pop %v78
    %v80 = vmul.f32 %v79, 0.6931472
    %v81 = vmul.f32 -0.5, %v68
    %v82 = vadd.f32 %v81, 1.0
    %v83 = vmul.f32 %v82, %v68
    %v84 = vand.u32 2147483647, %v68
    %vm85 = vcmp.lt.f32.partialorder %v84, 0.0004427343
    %v86 = vsel %vm85, %v83, %v80
    %v87 = vmin.f32 %v57, 0.0
    %v88 = vmin.f32 %v58, 0.0
    %v89 = vsub.f32 %v87, %v77
    %v90 = vsub.f32 %v88, %v86
    %v91 = vsub.f32 0.0, %v57
    %v92 = vsub.f32 0.0, %v58
    %v93 = vmin.f32 %v91, 0.0
    %v94 = vmin.f32 %v92, 0.0
    %v95 = vsub.f32 %v93, %v77
    %v96 = vsub.f32 %v94, %v86
    %v97 = vmul.f32 %v59, %v89
    %v98 = vmul.f32 %v60, %v90
    %v99 = vsub.f32 1.0, %v59
    %v100 = vsub.f32 1.0, %v60
    %v101 = vmul.f32 %v99, %v95
    %v102 = vmul.f32 %v100, %v96
    %v103 = vadd.f32 %v97, %v101
    %v104 = vadd.f32 %v98, %v102
    %v105 = vsub.f32 0.0, %v103
    %v106 = vsub.f32 0.0, %v104
    %v107 = vadd.f32 %v66, 1.0
    %v108 = vadd.f32 %v68, 1.0
    %v109 = vrcp.pop %v107
    %v110 = vmul.f32 1.0, %v109
    %v111 = vrcp.pop %v108
    %v112 = vmul.f32 1.0, %v111
    %vm113 = vcmp.ge.f32.partialorder %v57, 0.0
    %vm114 = vcmp.ge.f32.partialorder %v58, 0.0
    %v115 = vmul.f32 %v66, %v110
    %v116 = vmul.f32 %v68, %v112
    %v117 = vsel %vm113, %v110, %v115
    %v118 = vsel %vm114, %v112, %v116
    %v119 = vmul.f32 %v117, %v59
    %v120 = vmul.f32 %v118, %v60
    %v121 = vsub.f32 1.0, %v117
    %v122 = vsub.f32 1.0, %v118
    %v123 = vmul.f32 %v121, %v99
    %v124 = vmul.f32 %v122, %v100
    %v125 = vadd.f32 %v119, %v123
    %v126 = vadd.f32 %v120, %v124
    %v127 = vsub.f32 1.0, %v125
    %v128 = vsub.f32 1.0, %v126
    %v129 = vmul.f32 %v127, %v127
    %v130 = vmul.f32 %v128, %v128
    %v131 = vmul.f32 %v129, %v105
    %v132 = vmul.f32 %v130, %v106
    %v133 = vadd.f32 %v131, %v132
    %v134 = vrot.slane %v133, 4
    %v135 = vadd.f32 %v133, %v134
    %v136 = vrot.slane %v135, 2
    %v137 = vadd.f32 %v135, %v136
    %v138 = vrot.slane %v137, 1
    %v139 = vadd.f32 %v137, %v138
    %v140 = vld [vmem:[#allocation7] sm:$0x1]
    %v141 = vadd.f32 %v140, %v139
    %142 = vst [vmem:[#allocation7] sm:$0x1] %v141
    // Predicated region
    $region22: #{tpu_custom_call.1} parent=1 // pred_check
      _
    $region23: #{tpu_custom_call.1} parent=1 // pred_check_branch
      %144 = sbr.rel (0) target = $region25
    $region24: #{tpu_custom_call.1} parent=1 // pred_region
      %s146 = ssub.s32 16, 16
      %147 = vsyncadd [#allocation4], %s146
      %s149 = sshll.u32 [#allocation7], 4
      %s150 = int_to_ptr.vmem [resolvable:$true] %s149
      %152 = dma.vmem_to_hbm [thread:$0]  %s150, 16, %s2, [#allocation4]
    $region25: #{tpu_custom_call.1} parent=1 // pred_fallthru
      _
    // Predicated region
    $region26: #{tpu_custom_call.1} parent=1 // pred_check
      _
    $region27: #{tpu_custom_call.1} parent=1 // pred_check_branch
      %154 = sbr.rel (0) target = $region29
    $region28: #{tpu_custom_call.1} parent=1 // pred_region
      %155 = dma.done [#allocation4], 16
    $region29: #{tpu_custom_call.1} parent=1 // pred_fallthru
      _
    %156 = vsyncpa [#allocation3], 1
    %157 = vsyncpa [#allocation6], 1
    %158 = vsyncpa [#allocation4], 1

</llo_original>
